<compile_context>
chip_gen: v6e
topology: v6e:2x2x1
jax: 0.10.0
libtpu: 0.0.40
codegen_flags: <defaults>
</compile_context>

<pallas_src>
import functools

import jax
import jax.numpy as jnp
from jax.experimental import pallas as pl
from jax.experimental.pallas import tpu as pltpu

IN_F = 784    # 1*28*28
H = 200       # logical hidden width
H_P = 256     # lane-padded hidden width
NCLS = 10     # logical output width
OUT_P = 128   # lane-padded output width


def _round_up(n, m):
    return (n + m - 1) // m * m


def fcnn_kernel(x_ref, w1_ref, b1_ref, w2_ref, b2_ref, w3_ref, b3_ref, *rest,
                apply_dropout: bool):
    if apply_dropout:
        mask_ref, out_ref = rest
    else:
        (out_ref,) = rest

    x = x_ref[...]                                             # (TB, 784) bf16

    # fc1 + relu  (bf16 operands, f32 accumulate)
    h1 = jnp.dot(x, w1_ref[...], preferred_element_type=jnp.float32) + b1_ref[...]
    h1 = jnp.maximum(h1, 0.0).astype(jnp.bfloat16)             # (TB, 256)

    # fc2 + relu
    h2 = jnp.dot(h1, w2_ref[...], preferred_element_type=jnp.float32) + b2_ref[...]
    h2 = jnp.maximum(h2, 0.0)                                  # (TB, 256) f32

    # dropout(p): mask is pre-scaled {0, 1/(1-p)}
    if apply_dropout:
        h2 = h2 * mask_ref[...].astype(jnp.float32)
    h2 = h2.astype(jnp.bfloat16)

    # fc3 (padded output columns have zero weights and -1e30 bias -> softmax-ignored)
    logits = jnp.dot(h2, w3_ref[...], preferred_element_type=jnp.float32) + b3_ref[...]

    # softmax over features (f32)
    m = jnp.max(logits, axis=1, keepdims=True)
    e = jnp.exp(logits - m)
    out_ref[...] = (e / jnp.sum(e, axis=1, keepdims=True)).astype(out_ref.dtype)


def fcnn_forward(x, params, *, key=None, training=False, drop_p=0.5):
    """x: (B, 1, 28, 28) or (B, 784). Returns softmax probabilities (B, 10)."""
    w1, b1, w2, b2, w3, b3 = params
    B = x.shape[0]
    x2 = x.reshape(B, -1).astype(jnp.float32)                  # torch.flatten(x, 1)
    assert x2.shape[1] == IN_F

    # Batch tiling: small batches -> one tile; large batches -> 512-row tiles
    # (512x784 bf16 ~= 0.8 MiB/buffer; safe for v7x's 64 MiB VMEM with double buffering).
    TB = 512 if B >= 512 else _round_up(max(B, 1), 8)
    B_pad = _round_up(B, TB)
    grid = (B_pad // TB,)

    # Pad batch and cast streamed activations to bf16.
    x_p = jnp.zeros((B_pad, IN_F), jnp.bfloat16).at[:B].set(x2.astype(jnp.bfloat16))

    # Lane-dense padded parameters (weights bf16, biases f32).
    w1p = jnp.zeros((IN_F, H_P), jnp.bfloat16).at[:, :H].set(w1.astype(jnp.bfloat16))
    b1p = jnp.zeros((1, H_P), jnp.float32).at[0, :H].set(b1)
    w2p = jnp.zeros((H_P, H_P), jnp.bfloat16).at[:H, :H].set(w2.astype(jnp.bfloat16))
    b2p = jnp.zeros((1, H_P), jnp.float32).at[0, :H].set(b2)
    w3p = jnp.zeros((H_P, OUT_P), jnp.bfloat16).at[:H, :NCLS].set(w3.astype(jnp.bfloat16))
    b3p = jnp.full((1, OUT_P), -1e30, jnp.float32).at[0, :NCLS].set(b3)

    apply_dropout = bool(training) and drop_p > 0.0

    inputs = [x_p, w1p, b1p, w2p, b2p, w3p, b3p]
    in_specs = [
        pl.BlockSpec((TB, IN_F), lambda i: (i, 0)),        # x: streamed per batch tile
        pl.BlockSpec((IN_F, H_P), lambda i: (0, 0)),       # weights/biases: VMEM-resident
        pl.BlockSpec((1, H_P), lambda i: (0, 0)),
        pl.BlockSpec((H_P, H_P), lambda i: (0, 0)),
        pl.BlockSpec((1, H_P), lambda i: (0, 0)),
        pl.BlockSpec((H_P, OUT_P), lambda i: (0, 0)),
        pl.BlockSpec((1, OUT_P), lambda i: (0, 0)),
    ]

    if apply_dropout:
        if key is None:
            key = jax.random.PRNGKey(0)
        keep = jax.random.bernoulli(key, 1.0 - drop_p, (B_pad, H_P))
        mask = (keep.astype(jnp.float32) * (1.0 / (1.0 - drop_p))).astype(jnp.bfloat16)
        inputs.append(mask)
        in_specs.append(pl.BlockSpec((TB, H_P), lambda i: (i, 0)))

    flops = 2 * B_pad * (IN_F * H_P + H_P * H_P + H_P * OUT_P)
    bytes_accessed = (x_p.size * 2 + w1p.size * 2 + w2p.size * 2 + w3p.size * 2
                      + (b1p.size + b2p.size + b3p.size) * 4
                      + B_pad * OUT_P * 4
                      + (B_pad * H_P * 2 if apply_dropout else 0))
    cost = pl.CostEstimate(flops=flops, transcendentals=B_pad * OUT_P,
                           bytes_accessed=bytes_accessed)

    out = pl.pallas_call(
        functools.partial(fcnn_kernel, apply_dropout=apply_dropout),
        out_shape=jax.ShapeDtypeStruct((B_pad, OUT_P), jnp.float32),
        grid=grid,
        in_specs=in_specs,
        out_specs=pl.BlockSpec((TB, OUT_P), lambda i: (i, 0)),
        compiler_params=pltpu.CompilerParams(dimension_semantics=("parallel",)),
        cost_estimate=cost,
    )(*inputs)

    return out[:B, :NCLS]


def init_params(key):
    """Deterministic init mimicking torch.nn.Linear (uniform +-1/sqrt(fan_in))."""
    def linear(k, fan_in, fan_out):
        kw, kb = jax.random.split(k)
        bound = 1.0 / (fan_in ** 0.5)
        w = jax.random.uniform(kw, (fan_in, fan_out), jnp.float32, -bound, bound)
        b = jax.random.uniform(kb, (fan_out,), jnp.float32, -bound, bound)
        return w, b

    k1, k2, k3 = jax.random.split(key, 3)
    w1, b1 = linear(k1, IN_F, H)
    w2, b2 = linear(k2, H, H)
    w3, b3 = linear(k3, H, NCLS)
    return (w1, b1, w2, b2, w3, b3)


def fcnn_reference(x, params):
    """Pure-JAX f32 reference (eval mode) for a loose numerical check."""
    w1, b1, w2, b2, w3, b3 = params
    x2 = x.reshape(x.shape[0], -1).astype(jnp.float32)
    h1 = jnp.maximum(x2 @ w1 + b1, 0.0)
    h2 = jnp.maximum(h1 @ w2 + b2, 0.0)
    logits = h2 @ w3 + b3
    return jax.nn.softmax(logits, axis=1)


if __name__ == "__main__":
    root = jax.random.PRNGKey(0)
    kp, kx, kd = jax.random.split(root, 3)

    params = init_params(kp)
    x = jax.random.normal(kx, (8, 1, 28, 28), dtype=jnp.float32)  # B=8, MNIST-like

    # eval mode (dropout = identity), like model.eval() in torch
    y_eval = fcnn_forward(x, params, training=False)
    y_eval = jax.block_until_ready(y_eval)

    # train mode (dropout active)
    y_train = fcnn_forward(x, params, key=kd, training=True)
    y_train = jax.block_until_ready(y_train)

    assert y_eval.shape == (8, NCLS) and y_train.shape == (8, NCLS)
    # rows of softmax output sum to 1
    assert jnp.allclose(jnp.sum(y_eval, axis=1), 1.0, atol=1e-5)
    assert jnp.allclose(jnp.sum(y_train, axis=1), 1.0, atol=1e-5)
    # eval-mode output matches the f32 reference within bf16 matmul tolerance
    y_ref = fcnn_reference(x, params)
    assert jnp.allclose(y_eval, y_ref, atol=3e-2), float(jnp.max(jnp.abs(y_eval - y_ref)))

    print("KERNEL_OK")
</pallas_src>

<mosaic_0001>
module attributes {stable_mosaic.version = 11 : i64} {
  func.func @fcnn_kernel(%arg0: i32, %arg1: memref<8x784xbf16, #tpu.memory_space<vmem>>, %arg2: memref<784x256xbf16, #tpu.memory_space<vmem>>, %arg3: memref<1x256xf32, #tpu.memory_space<vmem>>, %arg4: memref<256x256xbf16, #tpu.memory_space<vmem>>, %arg5: memref<1x256xf32, #tpu.memory_space<vmem>>, %arg6: memref<256x128xbf16, #tpu.memory_space<vmem>>, %arg7: memref<1x128xf32, #tpu.memory_space<vmem>>, %arg8: memref<8x128xf32, #tpu.memory_space<vmem>>) attributes {dimension_semantics = [#tpu.dimension_semantics<parallel>], iteration_bounds = array<i64: 1>, scalar_prefetch = 0 : i64, scratch_operands = 0 : i64, tpu.core_type = #tpu.core_type<tc>, window_params = [{transform_indices = @transform_0, window_bounds = array<i64: 8, 784>}, {pipeline_mode = #tpu.pipeline_mode<synchronous>, transform_indices = @transform_1, window_bounds = array<i64: 784, 256>}, {pipeline_mode = #tpu.pipeline_mode<synchronous>, transform_indices = @transform_2, window_bounds = array<i64: 1, 256>}, {pipeline_mode = #tpu.pipeline_mode<synchronous>, transform_indices = @transform_3, window_bounds = array<i64: 256, 256>}, {pipeline_mode = #tpu.pipeline_mode<synchronous>, transform_indices = @transform_4, window_bounds = array<i64: 1, 256>}, {pipeline_mode = #tpu.pipeline_mode<synchronous>, transform_indices = @transform_5, window_bounds = array<i64: 256, 128>}, {pipeline_mode = #tpu.pipeline_mode<synchronous>, transform_indices = @transform_6, window_bounds = array<i64: 1, 128>}, {transform_indices = @transform_7, window_bounds = array<i64: 8, 128>}]} {
    %c0 = arith.constant 0 : index
    %c0_0 = arith.constant 0 : index
    %0 = vector.load %arg1[%c0, %c0_0] : memref<8x784xbf16, #tpu.memory_space<vmem>>, vector<8x784xbf16>
    %c0_1 = arith.constant 0 : index
    %c0_2 = arith.constant 0 : index
    %1 = vector.load %arg2[%c0_1, %c0_2] : memref<784x256xbf16, #tpu.memory_space<vmem>>, vector<784x256xbf16>
    %cst = arith.constant dense<0.000000e+00> : vector<8x256xf32>
    %2 = tpu.matmul %0, %1, %cst {dimension_numbers = #tpu.dot_dimension_numbers<[1], [0], [0], [1], [0, 0, 1, 1], [], []>} : vector<8x784xbf16>, vector<784x256xbf16>, vector<8x256xf32> -> vector<8x256xf32>
    %c0_3 = arith.constant 0 : index
    %c0_4 = arith.constant 0 : index
    %3 = vector.load %arg3[%c0_3, %c0_4] : memref<1x256xf32, #tpu.memory_space<vmem>>, vector<1x256xf32>
    %4 = vector.broadcast %3 : vector<1x256xf32> to vector<8x256xf32>
    %5 = arith.addf %2, %4 : vector<8x256xf32>
    %cst_5 = arith.constant 0.000000e+00 : f32
    %6 = vector.broadcast %cst_5 : f32 to vector<8x256xf32>
    %7 = arith.maximumf %5, %6 : vector<8x256xf32>
    %8 = arith.truncf %7 : vector<8x256xf32> to vector<8x256xbf16>
    %c0_6 = arith.constant 0 : index
    %c0_7 = arith.constant 0 : index
    %9 = vector.load %arg4[%c0_6, %c0_7] : memref<256x256xbf16, #tpu.memory_space<vmem>>, vector<256x256xbf16>
    %cst_8 = arith.constant dense<0.000000e+00> : vector<8x256xf32>
    %10 = tpu.matmul %8, %9, %cst_8 {dimension_numbers = #tpu.dot_dimension_numbers<[1], [0], [0], [1], [0, 0, 1, 1], [], []>} : vector<8x256xbf16>, vector<256x256xbf16>, vector<8x256xf32> -> vector<8x256xf32>
    %c0_9 = arith.constant 0 : index
    %c0_10 = arith.constant 0 : index
    %11 = vector.load %arg5[%c0_9, %c0_10] : memref<1x256xf32, #tpu.memory_space<vmem>>, vector<1x256xf32>
    %12 = vector.broadcast %11 : vector<1x256xf32> to vector<8x256xf32>
    %13 = arith.addf %10, %12 : vector<8x256xf32>
    %cst_11 = arith.constant 0.000000e+00 : f32
    %14 = vector.broadcast %cst_11 : f32 to vector<8x256xf32>
    %15 = arith.maximumf %13, %14 : vector<8x256xf32>
    %16 = arith.truncf %15 : vector<8x256xf32> to vector<8x256xbf16>
    %c0_12 = arith.constant 0 : index
    %c0_13 = arith.constant 0 : index
    %17 = vector.load %arg6[%c0_12, %c0_13] : memref<256x128xbf16, #tpu.memory_space<vmem>>, vector<256x128xbf16>
    %cst_14 = arith.constant dense<0.000000e+00> : vector<8x128xf32>
    %18 = tpu.matmul %16, %17, %cst_14 {dimension_numbers = #tpu.dot_dimension_numbers<[1], [0], [0], [1], [0, 0, 1, 1], [], []>} : vector<8x256xbf16>, vector<256x128xbf16>, vector<8x128xf32> -> vector<8x128xf32>
    %c0_15 = arith.constant 0 : index
    %c0_16 = arith.constant 0 : index
    %19 = vector.load %arg7[%c0_15, %c0_16] : memref<1x128xf32, #tpu.memory_space<vmem>>, vector<1x128xf32>
    %20 = vector.broadcast %19 : vector<1x128xf32> to vector<8x128xf32>
    %21 = arith.addf %18, %20 : vector<8x128xf32>
    %cst_17 = arith.constant dense<0xFF800000> : vector<8xf32>
    %22 = vector.multi_reduction <maximumf>, %21, %cst_17 [1] : vector<8x128xf32> to vector<8xf32>
    %23 = vector.shape_cast %22 : vector<8xf32> to vector<8x1xf32>
    %24 = vector.broadcast %23 : vector<8x1xf32> to vector<8x128xf32>
    %25 = arith.subf %21, %24 : vector<8x128xf32>
    %26 = math.exp %25 : vector<8x128xf32>
    %cst_18 = arith.constant dense<0.000000e+00> : vector<8xf32>
    %27 = vector.multi_reduction <add>, %26, %cst_18 [1] : vector<8x128xf32> to vector<8xf32>
    %28 = vector.shape_cast %27 : vector<8xf32> to vector<8x1xf32>
    %29 = vector.broadcast %28 : vector<8x1xf32> to vector<8x128xf32>
    %30 = arith.divf %26, %29 : vector<8x128xf32>
    %c0_19 = arith.constant 0 : index
    %c0_20 = arith.constant 0 : index
    %31 = vector.load %arg8[%c0_19, %c0_20] : memref<8x128xf32, #tpu.memory_space<vmem>>, vector<8x128xf32>
    tpu.vector_store %arg8[%c0_19, %c0_20], %30 {strides = array<i32>} : memref<8x128xf32, #tpu.memory_space<vmem>>, vector<8x128xf32>,
    return
  }
  func.func @transform_0(%arg0: i32) -> (i32, i32) {
    %c0_i32 = arith.constant 0 : i32
    %c0_i32_0 = arith.constant 0 : i32
    return %arg0, %c0_i32 : i32, i32
  }
  func.func @transform_1(%arg0: i32) -> (i32, i32) {
    %c0_i32 = arith.constant 0 : i32
    %c0_i32_0 = arith.constant 0 : i32
    %c0_i32_1 = arith.constant 0 : i32
    return %c0_i32, %c0_i32_0 : i32, i32
  }
  func.func @transform_2(%arg0: i32) -> (i32, i32) {
    %c0_i32 = arith.constant 0 : i32
    %c0_i32_0 = arith.constant 0 : i32
    %c0_i32_1 = arith.constant 0 : i32
    return %c0_i32, %c0_i32_0 : i32, i32
  }
  func.func @transform_3(%arg0: i32) -> (i32, i32) {
    %c0_i32 = arith.constant 0 : i32
    %c0_i32_0 = arith.constant 0 : i32
    %c0_i32_1 = arith.constant 0 : i32
    return %c0_i32, %c0_i32_0 : i32, i32
  }
  func.func @transform_4(%arg0: i32) -> (i32, i32) {
    %c0_i32 = arith.constant 0 : i32
    %c0_i32_0 = arith.constant 0 : i32
    %c0_i32_1 = arith.constant 0 : i32
    return %c0_i32, %c0_i32_0 : i32, i32
  }
  func.func @transform_5(%arg0: i32) -> (i32, i32) {
    %c0_i32 = arith.constant 0 : i32
    %c0_i32_0 = arith.constant 0 : i32
    %c0_i32_1 = arith.constant 0 : i32
    return %c0_i32, %c0_i32_0 : i32, i32
  }
  func.func @transform_6(%arg0: i32) -> (i32, i32) {
    %c0_i32 = arith.constant 0 : i32
    %c0_i32_0 = arith.constant 0 : i32
    %c0_i32_1 = arith.constant 0 : i32
    return %c0_i32, %c0_i32_0 : i32, i32
  }
  func.func @transform_7(%arg0: i32) -> (i32, i32) {
    %c0_i32 = arith.constant 0 : i32
    %c0_i32_0 = arith.constant 0 : i32
    return %arg0, %c0_i32 : i32, i32
  }
}

</mosaic_0001>

<llo_original>
// kernel: tpu_custom_call.1
$region0: #{tpu_custom_call.1}
  #allocation0 [shape = 'u32[]', space=smem, size = 0x4, offset = 0x4, fixed_abs, tag = 'smem constant byte address 0x4 - core index']
  #allocation1 [shape = 'u32[144,128]{1,0:T(1,128)}', space=vmem, size = 0x12000, scoped, tag = 'internal scratch']
  %s0 = inlined_call_operand.hbm [shape: bf16[8,784], index: 0, kind: input, shape index: {}]
  %s1 = inlined_call_operand.hbm [shape: bf16[784,256], index: 1, kind: input, shape index: {}]
  %s2 = inlined_call_operand.vmem [shape: f32[1,256], index: 2, kind: input, shape index: {}]
  %s3 = inlined_call_operand.hbm [shape: bf16[256,256], index: 3, kind: input, shape index: {}]
  %s4 = inlined_call_operand.vmem [shape: f32[1,256], index: 4, kind: input, shape index: {}]
  %s5 = inlined_call_operand.hbm [shape: bf16[256,128], index: 5, kind: input, shape index: {}]
  %s6 = inlined_call_operand.vmem [shape: f32[1,128], index: 6, kind: input, shape index: {}]
  %s7 = inlined_call_operand.hbm [shape: f32[8,128], index: 7, kind: output, shape index: {}]
  %s8 = sld [smem:[#allocation0]]
  $region54: #{tpu_custom_call.1} parent=0
    _
  %s10 = ssub.s32 1, %s8
  %s11 = scalar_select 0, %s10, %s8
  $region1: #{tpu_custom_call.1} parent=0
    #allocation2 [shape = 'u8[14336]{0}', space=vmem, size = 0x3800, scoped, tag = 'input window, operand 0, single buffered']
    #allocation3 [shape = 's32[1]{0}', space=sflag, size = 0x4, scoped, tag = 'scoped memory for tpu_custom_call.1']
    #allocation4 [shape = 's32[1]{0}', space=sflag, size = 0x4, scoped, tag = 'scoped memory for tpu_custom_call.1']
    #allocation5 [shape = 'u8[401408]{0}', space=vmem, size = 0x62000, scoped, tag = 'input window, operand 1, single buffered']
    #allocation6 [shape = 's32[1]{0}', space=sflag, size = 0x4, scoped, tag = 'scoped memory for tpu_custom_call.1']
    #allocation7 [shape = 'u8[131072]{0}', space=vmem, size = 0x20000, scoped, tag = 'input window, operand 3, single buffered']
    #allocation8 [shape = 'u8[65536]{0}', space=vmem, size = 0x10000, scoped, tag = 'input window, operand 5, single buffered']
    #allocation9 [shape = 's32[1]{0}', space=sflag, size = 0x4, scoped, tag = 'scoped memory for tpu_custom_call.1']
    #allocation10 [shape = 'u8[4096]{0}', space=vmem, size = 0x1000, scoped, tag = 'output window, operand 0, single buffered']
    %12 = vsyncpa [#allocation3], 0
    %13 = vsyncpa [#allocation6], 0
    %14 = vsyncpa [#allocation9], 0
    %15 = vsyncpa [#allocation4], 0
    // Predicated region
    $region2: #{tpu_custom_call.1} parent=1 // pred_check
      _
    $region3: #{tpu_custom_call.1} parent=1 // pred_check_branch
      %17 = sbr.rel (0) target = $region5
    $region4: #{tpu_custom_call.1} parent=1 // pred_region
      %s19 = ssub.s32 448, 448
      %20 = vsyncadd [#allocation3], %s19
      %s22 = sshll.u32 [#allocation2], 4
      %s23 = int_to_ptr.vmem [resolvable:$true] %s22
      %25 = dma.hbm_to_vmem [thread:$0]  %s0, 448, %s23, [#allocation3]
    $region5: #{tpu_custom_call.1} parent=1 // pred_fallthru
      _
    // Predicated region
    $region6: #{tpu_custom_call.1} parent=1 // pred_check
      _
    $region7: #{tpu_custom_call.1} parent=1 // pred_check_branch
      %27 = sbr.rel (0) target = $region9
    $region8: #{tpu_custom_call.1} parent=1 // pred_region
      %s29 = ssub.s32 12544, 12544
      %30 = vsyncadd [#allocation6], %s29
      %s31 = sshll.u32 [#allocation5], 4
      %s32 = int_to_ptr.vmem [resolvable:$true] %s31
      %37 = dma.hbm_to_vmem [thread:$0]  %s1, 12544, %s32, [#allocation6], 128, 128, 8
    $region9: #{tpu_custom_call.1} parent=1 // pred_fallthru
      _
    // Predicated region
    $region10: #{tpu_custom_call.1} parent=1 // pred_check
      _
    $region11: #{tpu_custom_call.1} parent=1 // pred_check_branch
      %39 = sbr.rel (0) target = $region13
    $region12: #{tpu_custom_call.1} parent=1 // pred_region
      _
    $region13: #{tpu_custom_call.1} parent=1 // pred_fallthru
      _
    // Predicated region
    $region14: #{tpu_custom_call.1} parent=1 // pred_check
      _
    $region15: #{tpu_custom_call.1} parent=1 // pred_check_branch
      %41 = sbr.rel (0) target = $region17
    $region16: #{tpu_custom_call.1} parent=1 // pred_region
      %s43 = ssub.s32 4096, 4096
      %44 = vsyncadd [#allocation6], %s43
      %s45 = sshll.u32 [#allocation7], 4
      %s46 = int_to_ptr.vmem [resolvable:$true] %s45
      %51 = dma.hbm_to_vmem [thread:$0]  %s3, 4096, %s46, [#allocation6], 128, 128, 8
    $region17: #{tpu_custom_call.1} parent=1 // pred_fallthru
      _
    // Predicated region
    $region18: #{tpu_custom_call.1} parent=1 // pred_check
      _
    $region19: #{tpu_custom_call.1} parent=1 // pred_check_branch
      %53 = sbr.rel (0) target = $region21
    $region20: #{tpu_custom_call.1} parent=1 // pred_region
      _
    $region21: #{tpu_custom_call.1} parent=1 // pred_fallthru
      _
    // Predicated region
    $region22: #{tpu_custom_call.1} parent=1 // pred_check
      _
    $region23: #{tpu_custom_call.1} parent=1 // pred_check_branch
      %55 = sbr.rel (0) target = $region25
    $region24: #{tpu_custom_call.1} parent=1 // pred_region
      %s57 = ssub.s32 2048, 2048
      %58 = vsyncadd [#allocation9], %s57
      %s59 = sshll.u32 [#allocation8], 4
      %s60 = int_to_ptr.vmem [resolvable:$true] %s59
      %65 = dma.hbm_to_vmem [thread:$0]  %s5, 2048, %s60, [#allocation9], 64, 64, 4
    $region25: #{tpu_custom_call.1} parent=1 // pred_fallthru
      _
    // Predicated region
    $region26: #{tpu_custom_call.1} parent=1 // pred_check
      _
    $region27: #{tpu_custom_call.1} parent=1 // pred_check_branch
      %67 = sbr.rel (0) target = $region29
    $region28: #{tpu_custom_call.1} parent=1 // pred_region
      _
    $region29: #{tpu_custom_call.1} parent=1 // pred_fallthru
      _
    // Predicated region
    $region30: #{tpu_custom_call.1} parent=1 // pred_check
      _
    $region31: #{tpu_custom_call.1} parent=1 // pred_check_branch
      %69 = sbr.rel (0) target = $region33
    $region32: #{tpu_custom_call.1} parent=1 // pred_region
      %70 = dma.done [#allocation3], 448
    $region33: #{tpu_custom_call.1} parent=1 // pred_fallthru
      _
    // Predicated region
    $region34: #{tpu_custom_call.1} parent=1 // pred_check
      _
    $region35: #{tpu_custom_call.1} parent=1 // pred_check_branch
      %72 = sbr.rel (0) target = $region37
    $region36: #{tpu_custom_call.1} parent=1 // pred_region
      %73 = dma.done [#allocation6], 12544
    $region37: #{tpu_custom_call.1} parent=1 // pred_fallthru
      _
    // Predicated region
    $region38: #{tpu_custom_call.1} parent=1 // pred_check
      _
    $region39: #{tpu_custom_call.1} parent=1 // pred_check_branch
      %75 = sbr.rel (0) target = $region41
    $region40: #{tpu_custom_call.1} parent=1 // pred_region
      %76 = dma.done [#allocation6], 4096
    $region41: #{tpu_custom_call.1} parent=1 // pred_fallthru
      _
    // Predicated region
    $region42: #{tpu_custom_call.1} parent=1 // pred_check
      _
    $region43: #{tpu_custom_call.1} parent=1 // pred_check_branch
      %78 = sbr.rel (0) target = $region45
    $region44: #{tpu_custom_call.1} parent=1 // pred_region
      %79 = dma.done [#allocation9], 2048
    $region45: #{tpu_custom_call.1} parent=1 // pred_fallthru
      _
    %v81 = vld [vmem:[#allocation2] sm:$0xff]
    %v82 = vld [vmem:[#allocation2 + $0x8] sm:$0xff]
    %v83 = vld [vmem:[#allocation2 + $0x10] sm:$0xff]
    %v84 = vld [vmem:[#allocation2 + $0x18] sm:$0xf]
    %v85 = vld [vmem:[#allocation5] sm:$0xff]
    %v86 = vld [vmem:[#allocation5 + $0x8] sm:$0xff]
    %v87 = vld [vmem:[#allocation5 + $0x10] sm:$0xff]
    %v88 = vld [vmem:[#allocation5 + $0x18] sm:$0xff]
    %v89 = vld [vmem:[#allocation5 + $0x20] sm:$0xff]
    %v90 = vld [vmem:[#allocation5 + $0x28] sm:$0xff]
    %v91 = vld [vmem:[#allocation5 + $0x30] sm:$0xff]
    %v92 = vld [vmem:[#allocation5 + $0x38] sm:$0xff]
    %v93 = vld [vmem:[#allocation5 + $0x40] sm:$0xff]
    %v94 = vld [vmem:[#allocation5 + $0x48] sm:$0xff]
    %v95 = vld [vmem:[#allocation5 + $0x50] sm:$0xff]
    %v96 = vld [vmem:[#allocation5 + $0x58] sm:$0xff]
    %v97 = vld [vmem:[#allocation5 + $0x60] sm:$0xff]
    %v98 = vld [vmem:[#allocation5 + $0x68] sm:$0xff]
    %v99 = vld [vmem:[#allocation5 + $0x70] sm:$0xff]
    %v100 = vld [vmem:[#allocation5 + $0x78] sm:$0xff]
    %v101 = vld [vmem:[#allocation5 + $0x80] sm:$0xff]
    %v102 = vld [vmem:[#allocation5 + $0x88] sm:$0xff]
    %v103 = vld [vmem:[#allocation5 + $0x90] sm:$0xff]
    %v104 = vld [vmem:[#allocation5 + $0x98] sm:$0xff]
    %v105 = vld [vmem:[#allocation5 + $0xa0] sm:$0xff]
    %v106 = vld [vmem:[#allocation5 + $0xa8] sm:$0xff]
    %v107 = vld [vmem:[#allocation5 + $0xb0] sm:$0xff]
    %v108 = vld [vmem:[#allocation5 + $0xb8] sm:$0xff]
    %v109 = vld [vmem:[#allocation5 + $0xc0] sm:$0xff]
    %v110 = vld [vmem:[#allocation5 + $0xc8] sm:$0xff]
    %v111 = vld [vmem:[#allocation5 + $0xd0] sm:$0xff]
    %v112 = vld [vmem:[#allocation5 + $0xd8] sm:$0xff]
    %v113 = vld [vmem:[#allocation5 + $0xe0] sm:$0xff]
    %v114 = vld [vmem:[#allocation5 + $0xe8] sm:$0xff]
    %v115 = vld [vmem:[#allocation5 + $0xf0] sm:$0xff]
    %v116 = vld [vmem:[#allocation5 + $0xf8] sm:$0xff]
    %v117 = vld [vmem:[#allocation5 + $0x100] sm:$0xff]
    %v118 = vld [vmem:[#allocation5 + $0x108] sm:$0xff]
    %v119 = vld [vmem:[#allocation5 + $0x110] sm:$0xff]
    %v120 = vld [vmem:[#allocation5 + $0x118] sm:$0xff]
    %v121 = vld [vmem:[#allocation5 + $0x120] sm:$0xff]
    %v122 = vld [vmem:[#allocation5 + $0x128] sm:$0xff]
    %v123 = vld [vmem:[#allocation5 + $0x130] sm:$0xff]
    %v124 = vld [vmem:[#allocation5 + $0x138] sm:$0xff]
    %v125 = vld [vmem:[#allocation5 + $0x140] sm:$0xff]
    %v126 = vld [vmem:[#allocation5 + $0x148] sm:$0xff]
    %v127 = vld [vmem:[#allocation5 + $0x150] sm:$0xff]
    %v128 = vld [vmem:[#allocation5 + $0x158] sm:$0xff]
    %v129 = vld [vmem:[#allocation5 + $0x160] sm:$0xff]
    %v130 = vld [vmem:[#allocation5 + $0x168] sm:$0xff]
    %v131 = vld [vmem:[#allocation5 + $0x170] sm:$0xff]
    %v132 = vld [vmem:[#allocation5 + $0x178] sm:$0xff]
    %v133 = vld [vmem:[#allocation5 + $0x180] sm:$0xff]
    %v134 = vld [vmem:[#allocation5 + $0x188] sm:$0xff]
    %v135 = vld [vmem:[#allocation5 + $0x190] sm:$0xff]
    %v136 = vld [vmem:[#allocation5 + $0x198] sm:$0xff]
    %v137 = vld [vmem:[#allocation5 + $0x1a0] sm:$0xff]
    %v138 = vld [vmem:[#allocation5 + $0x1a8] sm:$0xff]
    %v139 = vld [vmem:[#allocation5 + $0x1b0] sm:$0xff]
    %v140 = vld [vmem:[#allocation5 + $0x1b8] sm:$0xff]
    %v141 = vld [vmem:[#allocation5 + $0x1c0] sm:$0xff]
    %v142 = vld [vmem:[#allocation5 + $0x1c8] sm:$0xff]
    %v143 = vld [vmem:[#allocation5 + $0x1d0] sm:$0xff]
    %v144 = vld [vmem:[#allocation5 + $0x1d8] sm:$0xff]
    %v145 = vld [vmem:[#allocation5 + $0x1e0] sm:$0xff]
    %v146 = vld [vmem:[#allocation5 + $0x1e8] sm:$0xff]
    %v147 = vld [vmem:[#allocation5 + $0x1f0] sm:$0xff]
    %v148 = vld [vmem:[#allocation5 + $0x1f8] sm:$0xff]
    %v149 = vld [vmem:[#allocation5 + $0x200] sm:$0xff]
    %v150 = vld [vmem:[#allocation5 + $0x208] sm:$0xff]
    %v151 = vld [vmem:[#allocation5 + $0x210] sm:$0xff]
    %v152 = vld [vmem:[#allocation5 + $0x218] sm:$0xff]
    %v153 = vld [vmem:[#allocation5 + $0x220] sm:$0xff]
    %v154 = vld [vmem:[#allocation5 + $0x228] sm:$0xff]
    %v155 = vld [vmem:[#allocation5 + $0x230] sm:$0xff]
    %v156 = vld [vmem:[#allocation5 + $0x238] sm:$0xff]
    %v157 = vld [vmem:[#allocation5 + $0x240] sm:$0xff]
    %v158 = vld [vmem:[#allocation5 + $0x248] sm:$0xff]
    %v159 = vld [vmem:[#allocation5 + $0x250] sm:$0xff]
    %v160 = vld [vmem:[#allocation5 + $0x258] sm:$0xff]
    %v161 = vld [vmem:[#allocation5 + $0x260] sm:$0xff]
    %v162 = vld [vmem:[#allocation5 + $0x268] sm:$0xff]
    %v163 = vld [vmem:[#allocation5 + $0x270] sm:$0xff]
    %v164 = vld [vmem:[#allocation5 + $0x278] sm:$0xff]
    %v165 = vld [vmem:[#allocation5 + $0x280] sm:$0xff]
    %v166 = vld [vmem:[#allocation5 + $0x288] sm:$0xff]
    %v167 = vld [vmem:[#allocation5 + $0x290] sm:$0xff]
    %v168 = vld [vmem:[#allocation5 + $0x298] sm:$0xff]
    %v169 = vld [vmem:[#allocation5 + $0x2a0] sm:$0xff]
    %v170 = vld [vmem:[#allocation5 + $0x2a8] sm:$0xff]
    %v171 = vld [vmem:[#allocation5 + $0x2b0] sm:$0xff]
    %v172 = vld [vmem:[#allocation5 + $0x2b8] sm:$0xff]
    %v173 = vld [vmem:[#allocation5 + $0x2c0] sm:$0xff]
    %v174 = vld [vmem:[#allocation5 + $0x2c8] sm:$0xff]
    %v175 = vld [vmem:[#allocation5 + $0x2d0] sm:$0xff]
    %v176 = vld [vmem:[#allocation5 + $0x2d8] sm:$0xff]
    %v177 = vld [vmem:[#allocation5 + $0x2e0] sm:$0xff]
    %v178 = vld [vmem:[#allocation5 + $0x2e8] sm:$0xff]
    %v179 = vld [vmem:[#allocation5 + $0x2f0] sm:$0xff]
    %v180 = vld [vmem:[#allocation5 + $0x2f8] sm:$0xff]
    %v181 = vld [vmem:[#allocation5 + $0x300] sm:$0xff]
    %v182 = vld [vmem:[#allocation5 + $0x308] sm:$0xff]
    %v183 = vld [vmem:[%s2] sm:$0x3]
    %v185 = vlaneseq
    %v186 = vshrl.u32 %v185, 7
    %v187 = vsub.s32 0, %v186
    %v188 = vrot.slane %v183, %v187
    %v189 = vlaneseq
    %v190 = vshrl.u32 %v189, 7
    %v191 = vsub.s32 1, %v190
    %v192 = vrot.slane %v183, %v191
    %v199 = vunpack.c.l.b16 %v81
    %v200 = vunpack.c.h.b16 %v81
    %v201 = vunpack.c.l.b16 %v82
    %v202 = vunpack.c.h.b16 %v82
    %v203 = vunpack.c.l.b16 %v83
    %v204 = vunpack.c.h.b16 %v83
    %v205 = vunpack.c.l.b16 %v84
    %v206 = vpack.c.b16 %v199, %v199
    %v207 = vpack.c.b16 %v200, %v200
    %v208 = vpack.c.b16 %v201, %v201
    %v209 = vpack.c.b16 %v202, %v202
    %v210 = vpack.c.b16 %v203, %v203
    %v211 = vpack.c.b16 %v204, %v204
    %v212 = vpack.c.b16 %v205, %v205
    %v317 = vunpack.c.l.b16 %v85
    %v318 = vunpack.c.h.b16 %v85
    %v319 = vunpack.c.l.b16 %v86
    %v320 = vunpack.c.h.b16 %v86
    %v321 = vunpack.c.l.b16 %v87
    %v322 = vunpack.c.h.b16 %v87
    %v323 = vunpack.c.l.b16 %v88
    %v324 = vunpack.c.h.b16 %v88
    %v325 = vunpack.c.l.b16 %v89
    %v326 = vunpack.c.h.b16 %v89
    %v327 = vunpack.c.l.b16 %v90
    %v328 = vunpack.c.h.b16 %v90
    %v329 = vunpack.c.l.b16 %v91
    %v330 = vunpack.c.h.b16 %v91
    %v331 = vunpack.c.l.b16 %v92
    %v332 = vunpack.c.h.b16 %v92
    %v333 = vunpack.c.l.b16 %v93
    %v334 = vunpack.c.h.b16 %v93
    %v335 = vunpack.c.l.b16 %v94
    %v336 = vunpack.c.h.b16 %v94
    %v337 = vunpack.c.l.b16 %v95
    %v338 = vunpack.c.h.b16 %v95
    %v339 = vunpack.c.l.b16 %v96
    %v340 = vunpack.c.h.b16 %v96
    %v341 = vunpack.c.l.b16 %v97
    %v342 = vunpack.c.h.b16 %v97
    %v343 = vunpack.c.l.b16 %v98
    %v344 = vunpack.c.h.b16 %v98
    %v345 = vunpack.c.l.b16 %v99
    %v346 = vunpack.c.h.b16 %v99
    %v347 = vunpack.c.l.b16 %v100
    %v348 = vunpack.c.h.b16 %v100
    %v349 = vunpack.c.l.b16 %v101
    %v350 = vunpack.c.h.b16 %v101
    %v351 = vunpack.c.l.b16 %v102
    %v352 = vunpack.c.h.b16 %v102
    %v353 = vunpack.c.l.b16 %v103
    %v354 = vunpack.c.h.b16 %v103
    %v355 = vunpack.c.l.b16 %v104
    %v356 = vunpack.c.h.b16 %v104
    %v357 = vunpack.c.l.b16 %v105
    %v358 = vunpack.c.h.b16 %v105
    %v359 = vunpack.c.l.b16 %v106
    %v360 = vunpack.c.h.b16 %v106
    %v361 = vunpack.c.l.b16 %v107
    %v362 = vunpack.c.h.b16 %v107
    %v363 = vunpack.c.l.b16 %v108
    %v364 = vunpack.c.h.b16 %v108
    %v365 = vunpack.c.l.b16 %v109
    %v366 = vunpack.c.h.b16 %v109
    %v367 = vunpack.c.l.b16 %v110
    %v368 = vunpack.c.h.b16 %v110
    %v369 = vunpack.c.l.b16 %v111
    %v370 = vunpack.c.h.b16 %v111
    %v371 = vunpack.c.l.b16 %v112
    %v372 = vunpack.c.h.b16 %v112
    %v373 = vunpack.c.l.b16 %v113
    %v374 = vunpack.c.h.b16 %v113
    %v375 = vunpack.c.l.b16 %v114
    %v376 = vunpack.c.h.b16 %v114
    %v377 = vunpack.c.l.b16 %v115
    %v378 = vunpack.c.h.b16 %v115
    %v379 = vunpack.c.l.b16 %v116
    %v380 = vunpack.c.h.b16 %v116
    %v381 = vunpack.c.l.b16 %v117
    %v382 = vunpack.c.h.b16 %v117
    %v383 = vunpack.c.l.b16 %v118
    %v384 = vunpack.c.h.b16 %v118
    %v385 = vunpack.c.l.b16 %v119
    %v386 = vunpack.c.h.b16 %v119
    %v387 = vunpack.c.l.b16 %v120
    %v388 = vunpack.c.h.b16 %v120
    %v389 = vunpack.c.l.b16 %v121
    %v390 = vunpack.c.h.b16 %v121
    %v391 = vunpack.c.l.b16 %v122
    %v392 = vunpack.c.h.b16 %v122
    %v393 = vunpack.c.l.b16 %v123
    %v394 = vunpack.c.h.b16 %v123
    %v395 = vunpack.c.l.b16 %v124
    %v396 = vunpack.c.h.b16 %v124
    %v397 = vunpack.c.l.b16 %v125
    %v398 = vunpack.c.h.b16 %v125
    %v399 = vunpack.c.l.b16 %v126
    %v400 = vunpack.c.h.b16 %v126
    %v401 = vunpack.c.l.b16 %v127
    %v402 = vunpack.c.h.b16 %v127
    %v403 = vunpack.c.l.b16 %v128
    %v404 = vunpack.c.h.b16 %v128
    %v405 = vunpack.c.l.b16 %v129
    %v406 = vunpack.c.h.b16 %v129
    %v407 = vunpack.c.l.b16 %v130
    %v408 = vunpack.c.h.b16 %v130
    %v409 = vunpack.c.l.b16 %v131
    %v410 = vunpack.c.h.b16 %v131
    %v411 = vunpack.c.l.b16 %v132
    %v412 = vunpack.c.h.b16 %v132
    %v413 = vunpack.c.l.b16 %v133
    %v414 = vunpack.c.h.b16 %v133
    %v415 = vunpack.c.l.b16 %v134
    %v416 = vunpack.c.h.b16 %v134
    %v417 = vunpack.c.l.b16 %v135
    %v418 = vunpack.c.h.b16 %v135
    %v419 = vunpack.c.l.b16 %v136
    %v420 = vunpack.c.h.b16 %v136
    %v421 = vunpack.c.l.b16 %v137
    %v422 = vunpack.c.h.b16 %v137
    %v423 = vunpack.c.l.b16 %v138
    %v424 = vunpack.c.h.b16 %v138
    %v425 = vunpack.c.l.b16 %v139
    %v426 = vunpack.c.h.b16 %v139
    %v427 = vunpack.c.l.b16 %v140
    %v428 = vunpack.c.h.b16 %v140
    %v429 = vunpack.c.l.b16 %v141
    %v430 = vunpack.c.h.b16 %v141
    %v431 = vunpack.c.l.b16 %v142
    %v432 = vunpack.c.h.b16 %v142
    %v433 = vunpack.c.l.b16 %v143
    %v434 = vunpack.c.h.b16 %v143
    %v435 = vunpack.c.l.b16 %v144
    %v436 = vunpack.c.h.b16 %v144
    %v437 = vunpack.c.l.b16 %v145
    %v438 = vunpack.c.h.b16 %v145
    %v439 = vunpack.c.l.b16 %v146
    %v440 = vunpack.c.h.b16 %v146
    %v441 = vunpack.c.l.b16 %v147
    %v442 = vunpack.c.h.b16 %v147
    %v443 = vunpack.c.l.b16 %v148
    %v444 = vunpack.c.h.b16 %v148
    %v445 = vunpack.c.l.b16 %v149
    %v446 = vunpack.c.h.b16 %v149
    %v447 = vunpack.c.l.b16 %v150
    %v448 = vunpack.c.h.b16 %v150
    %v449 = vunpack.c.l.b16 %v151
    %v450 = vunpack.c.h.b16 %v151
    %v451 = vunpack.c.l.b16 %v152
    %v452 = vunpack.c.h.b16 %v152
    %v453 = vunpack.c.l.b16 %v153
    %v454 = vunpack.c.h.b16 %v153
    %v455 = vunpack.c.l.b16 %v154
    %v456 = vunpack.c.h.b16 %v154
    %v457 = vunpack.c.l.b16 %v155
    %v458 = vunpack.c.h.b16 %v155
    %v459 = vunpack.c.l.b16 %v156
    %v460 = vunpack.c.h.b16 %v156
    %v461 = vunpack.c.l.b16 %v157
    %v462 = vunpack.c.h.b16 %v157
    %v463 = vunpack.c.l.b16 %v158
    %v464 = vunpack.c.h.b16 %v158
    %v465 = vunpack.c.l.b16 %v159
    %v466 = vunpack.c.h.b16 %v159
    %v467 = vunpack.c.l.b16 %v160
    %v468 = vunpack.c.h.b16 %v160
    %v469 = vunpack.c.l.b16 %v161
    %v470 = vunpack.c.h.b16 %v161
    %v471 = vunpack.c.l.b16 %v162
    %v472 = vunpack.c.h.b16 %v162
    %v473 = vunpack.c.l.b16 %v163
    %v474 = vunpack.c.h.b16 %v163
    %v475 = vunpack.c.l.b16 %v164
    %v476 = vunpack.c.h.b16 %v164
    %v477 = vunpack.c.l.b16 %v165
    %v478 = vunpack.c.h.b16 %v165
    %v479 = vunpack.c.l.b16 %v166
    %v480 = vunpack.c.h.b16 %v166
    %v481 = vunpack.c.l.b16 %v167
    %v482 = vunpack.c.h.b16 %v167
    %v483 = vunpack.c.l.b16 %v168
    %v484 = vunpack.c.h.b16 %v168
    %v485 = vunpack.c.l.b16 %v169
    %v486 = vunpack.c.h.b16 %v169
    %v487 = vunpack.c.l.b16 %v170
    %v488 = vunpack.c.h.b16 %v170
    %v489 = vunpack.c.l.b16 %v171
    %v490 = vunpack.c.h.b16 %v171
    %v491 = vunpack.c.l.b16 %v172
    %v492 = vunpack.c.h.b16 %v172
    %v493 = vunpack.c.l.b16 %v173
    %v494 = vunpack.c.h.b16 %v173
    %v495 = vunpack.c.l.b16 %v174
    %v496 = vunpack.c.h.b16 %v174
    %v497 = vunpack.c.l.b16 %v175
    %v498 = vunpack.c.h.b16 %v175
    %v499 = vunpack.c.l.b16 %v176
    %v500 = vunpack.c.h.b16 %v176
    %v501 = vunpack.c.l.b16 %v177
    %v502 = vunpack.c.h.b16 %v177
    %v503 = vunpack.c.l.b16 %v178
    %v504 = vunpack.c.h.b16 %v178
    %v505 = vunpack.c.l.b16 %v179
    %v506 = vunpack.c.h.b16 %v179
    %v507 = vunpack.c.l.b16 %v180
    %v508 = vunpack.c.h.b16 %v180
    %v509 = vunpack.c.l.b16 %v181
    %v510 = vunpack.c.h.b16 %v181
    %v511 = vunpack.c.l.b16 %v182
    %v512 = vunpack.c.h.b16 %v182
    %v513 = vpack.c.b16 %v319, %v317
    %v514 = vpack.c.b16 %v320, %v318
    %v515 = vpack.c.b16 %v323, %v321
    %v516 = vpack.c.b16 %v324, %v322
    %v517 = vpack.c.b16 %v327, %v325
    %v518 = vpack.c.b16 %v328, %v326
    %v519 = vpack.c.b16 %v331, %v329
    %v520 = vpack.c.b16 %v332, %v330
    %v521 = vpack.c.b16 %v335, %v333
    %v522 = vpack.c.b16 %v336, %v334
    %v523 = vpack.c.b16 %v339, %v337
    %v524 = vpack.c.b16 %v340, %v338
    %v525 = vpack.c.b16 %v343, %v341
    %v526 = vpack.c.b16 %v344, %v342
    %v527 = vpack.c.b16 %v347, %v345
    %v528 = vpack.c.b16 %v348, %v346
    %v529 = vpack.c.b16 %v351, %v349
    %v530 = vpack.c.b16 %v352, %v350
    %v531 = vpack.c.b16 %v355, %v353
    %v532 = vpack.c.b16 %v356, %v354
    %v533 = vpack.c.b16 %v359, %v357
    %v534 = vpack.c.b16 %v360, %v358
    %v535 = vpack.c.b16 %v363, %v361
    %v536 = vpack.c.b16 %v364, %v362
    %v537 = vpack.c.b16 %v367, %v365
    %v538 = vpack.c.b16 %v368, %v366
    %v539 = vpack.c.b16 %v371, %v369
    %v540 = vpack.c.b16 %v372, %v370
    %v541 = vpack.c.b16 %v375, %v373
    %v542 = vpack.c.b16 %v376, %v374
    %v543 = vpack.c.b16 %v379, %v377
    %v544 = vpack.c.b16 %v380, %v378
    %v545 = vpack.c.b16 %v383, %v381
    %v546 = vpack.c.b16 %v384, %v382
    %v547 = vpack.c.b16 %v387, %v385
    %v548 = vpack.c.b16 %v388, %v386
    %v549 = vpack.c.b16 %v391, %v389
    %v550 = vpack.c.b16 %v392, %v390
    %v551 = vpack.c.b16 %v395, %v393
    %v552 = vpack.c.b16 %v396, %v394
    %v553 = vpack.c.b16 %v399, %v397
    %v554 = vpack.c.b16 %v400, %v398
    %v555 = vpack.c.b16 %v403, %v401
    %v556 = vpack.c.b16 %v404, %v402
    %v557 = vpack.c.b16 %v407, %v405
    %v558 = vpack.c.b16 %v408, %v406
    %v559 = vpack.c.b16 %v411, %v409
    %v560 = vpack.c.b16 %v412, %v410
    %v561 = vpack.c.b16 %v415, %v413
    %v562 = vpack.c.b16 %v416, %v414
    %v563 = vpack.c.b16 %v419, %v417
    %v564 = vpack.c.b16 %v420, %v418
    %v565 = vpack.c.b16 %v423, %v421
    %v566 = vpack.c.b16 %v424, %v422
    %v567 = vpack.c.b16 %v427, %v425
    %v568 = vpack.c.b16 %v428, %v426
    %v569 = vpack.c.b16 %v431, %v429
    %v570 = vpack.c.b16 %v432, %v430
    %v571 = vpack.c.b16 %v435, %v433
    %v572 = vpack.c.b16 %v436, %v434
    %v573 = vpack.c.b16 %v439, %v437
    %v574 = vpack.c.b16 %v440, %v438
    %v575 = vpack.c.b16 %v443, %v441
    %v576 = vpack.c.b16 %v444, %v442
    %v577 = vpack.c.b16 %v447, %v445
    %v578 = vpack.c.b16 %v448, %v446
    %v579 = vpack.c.b16 %v451, %v449
    %v580 = vpack.c.b16 %v452, %v450
    %v581 = vpack.c.b16 %v455, %v453
    %v582 = vpack.c.b16 %v456, %v454
    %v583 = vpack.c.b16 %v459, %v457
    %v584 = vpack.c.b16 %v460, %v458
    %v585 = vpack.c.b16 %v463, %v461
    %v586 = vpack.c.b16 %v464, %v462
    %v587 = vpack.c.b16 %v467, %v465
    %v588 = vpack.c.b16 %v468, %v466
    %v589 = vpack.c.b16 %v471, %v469
    %v590 = vpack.c.b16 %v472, %v470
    %v591 = vpack.c.b16 %v475, %v473
    %v592 = vpack.c.b16 %v476, %v474
    %v593 = vpack.c.b16 %v479, %v477
    %v594 = vpack.c.b16 %v480, %v478
    %v595 = vpack.c.b16 %v483, %v481
    %v596 = vpack.c.b16 %v484, %v482
    %v597 = vpack.c.b16 %v487, %v485
    %v598 = vpack.c.b16 %v488, %v486
    %v599 = vpack.c.b16 %v491, %v489
    %v600 = vpack.c.b16 %v492, %v490
    %v601 = vpack.c.b16 %v495, %v493
    %v602 = vpack.c.b16 %v496, %v494
    %v603 = vpack.c.b16 %v499, %v497
    %v604 = vpack.c.b16 %v500, %v498
    %v605 = vpack.c.b16 %v503, %v501
    %v606 = vpack.c.b16 %v504, %v502
    %v607 = vpack.c.b16 %v507, %v505
    %v608 = vpack.c.b16 %v508, %v506
    %v609 = vpack.c.b16 %v511, %v509
    %v610 = vpack.c.b16 %v512, %v510
    %vm709 = vcmask 130048
    %v711 = vsel %vm709, %v212, 0
    %713 = vmatprep.subr.bf16.mxu0 %v528
    %714 = vmatpush1.bf16.msra.mxu0 %v527
    %715 = vmatprep.subr.bf16.mxu0 %v526
    %716 = vmatpush1.bf16.msra.mxu0 %v525
    %717 = vmatprep.subr.bf16.mxu0 %v524
    %718 = vmatpush1.bf16.msra.mxu0 %v523
    %719 = vmatprep.subr.bf16.mxu0 %v522
    %720 = vmatpush1.bf16.msra.mxu0 %v521
    %721 = vmatprep.subr.bf16.mxu0 %v520
    %722 = vmatpush1.bf16.msra.mxu0 %v519
    %723 = vmatprep.subr.bf16.mxu0 %v518
    %724 = vmatpush1.bf16.msra.mxu0 %v517
    %725 = vmatprep.subr.bf16.mxu0 %v516
    %726 = vmatpush1.bf16.msra.mxu0 %v515
    %727 = vmatprep.subr.bf16.mxu0 %v514
    %728 = vmatpush1.bf16.msra.mxu0 %v513
    %729 = vmatprep.subr.bf16.mxu0 %v544
    %730 = vmatpush2.bf16.msra.mxu0 %v543
    %731 = vmatprep.subr.bf16.mxu0 %v542
    %732 = vmatpush2.bf16.msra.mxu0 %v541
    %733 = vmatprep.subr.bf16.mxu0 %v540
    %734 = vmatpush2.bf16.msra.mxu0 %v539
    %735 = vmatprep.subr.bf16.mxu0 %v538
    %736 = vmatpush2.bf16.msra.mxu0 %v537
    %737 = vmatprep.subr.bf16.mxu0 %v536
    %738 = vmatpush2.bf16.msra.mxu0 %v535
    %739 = vmatprep.subr.bf16.mxu0 %v534
    %740 = vmatpush2.bf16.msra.mxu0 %v533
    %741 = vmatprep.subr.bf16.mxu0 %v532
    %742 = vmatpush2.bf16.msra.mxu0 %v531
    %743 = vmatprep.subr.bf16.mxu0 %v530
    %744 = vmatpush2.bf16.msra.mxu0 %v529
    %745 = vmatprep.mubr.bf16.mxu0 %v207
    %746 = vmatmul.mubr.bf16.gmra.mxu0 %v206
    %v747 = vpop.f32.mrf.mxu0
    %v748 = vadd.f32 %v188, %v747
    %v749 = vpop.f32.mrf.mxu0
    %v750 = vadd.f32 %v192, %v749
    %v751 = vpop.f32.mrf.mxu0
    %v752 = vpop.f32.mrf.mxu0
    %753 = vdwg.mxu0
    %754 = vmatprep.subr.bf16.mxu0 %v560
    %755 = vmatpush1.bf16.msra.mxu0 %v559
    %756 = vmatprep.subr.bf16.mxu0 %v558
    %757 = vmatpush1.bf16.msra.mxu0 %v557
    %758 = vmatprep.subr.bf16.mxu0 %v556
    %759 = vmatpush1.bf16.msra.mxu0 %v555
    %760 = vmatprep.subr.bf16.mxu0 %v554
    %761 = vmatpush1.bf16.msra.mxu0 %v553
    %762 = vmatprep.subr.bf16.mxu0 %v552
    %763 = vmatpush1.bf16.msra.mxu0 %v551
    %764 = vmatprep.subr.bf16.mxu0 %v550
    %765 = vmatpush1.bf16.msra.mxu0 %v549
    %766 = vmatprep.subr.bf16.mxu0 %v548
    %767 = vmatpush1.bf16.msra.mxu0 %v547
    %768 = vmatprep.subr.bf16.mxu0 %v546
    %769 = vmatpush1.bf16.msra.mxu0 %v545
    %770 = vmatprep.subr.bf16.mxu0 %v576
    %771 = vmatpush2.bf16.msra.mxu0 %v575
    %772 = vmatprep.subr.bf16.mxu0 %v574
    %773 = vmatpush2.bf16.msra.mxu0 %v573
    %774 = vmatprep.subr.bf16.mxu0 %v572
    %775 = vmatpush2.bf16.msra.mxu0 %v571
    %776 = vmatprep.subr.bf16.mxu0 %v570
    %777 = vmatpush2.bf16.msra.mxu0 %v569
    %778 = vmatprep.subr.bf16.mxu0 %v568
    %779 = vmatpush2.bf16.msra.mxu0 %v567
    %780 = vmatprep.subr.bf16.mxu0 %v566
    %781 = vmatpush2.bf16.msra.mxu0 %v565
    %782 = vmatprep.subr.bf16.mxu0 %v564
    %783 = vmatpush2.bf16.msra.mxu0 %v563
    %784 = vmatprep.subr.bf16.mxu0 %v562
    %785 = vmatpush2.bf16.msra.mxu0 %v561
    %786 = vmatprep.mubr.bf16.mxu0 %v209
    %787 = vmatmul.mubr.bf16.gmra.mxu0 %v208
    %v788 = vpop.f32.mrf.mxu0
    %v789 = vadd.f32 %v748, %v788
    %v790 = vpop.f32.mrf.mxu0
    %v791 = vadd.f32 %v750, %v790
    %v792 = vpop.f32.mrf.mxu0
    %v793 = vpop.f32.mrf.mxu0
    %794 = vdwg.mxu0
    %795 = vmatprep.subr.bf16.mxu0 %v592
    %796 = vmatpush1.bf16.msra.mxu0 %v591
    %797 = vmatprep.subr.bf16.mxu0 %v590
    %798 = vmatpush1.bf16.msra.mxu0 %v589
    %799 = vmatprep.subr.bf16.mxu0 %v588
    %800 = vmatpush1.bf16.msra.mxu0 %v587
    %801 = vmatprep.subr.bf16.mxu0 %v586
    %802 = vmatpush1.bf16.msra.mxu0 %v585
    %803 = vmatprep.subr.bf16.mxu0 %v584
    %804 = vmatpush1.bf16.msra.mxu0 %v583
    %805 = vmatprep.subr.bf16.mxu0 %v582
    %806 = vmatpush1.bf16.msra.mxu0 %v581
    %807 = vmatprep.subr.bf16.mxu0 %v580
    %808 = vmatpush1.bf16.msra.mxu0 %v579
    %809 = vmatprep.subr.bf16.mxu0 %v578
    %810 = vmatpush1.bf16.msra.mxu0 %v577
    %811 = vmatprep.subr.bf16.mxu0 %v608
    %812 = vmatpush2.bf16.msra.mxu0 %v607
    %813 = vmatprep.subr.bf16.mxu0 %v606
    %814 = vmatpush2.bf16.msra.mxu0 %v605
    %815 = vmatprep.subr.bf16.mxu0 %v604
    %816 = vmatpush2.bf16.msra.mxu0 %v603
    %817 = vmatprep.subr.bf16.mxu0 %v602
    %818 = vmatpush2.bf16.msra.mxu0 %v601
    %819 = vmatprep.subr.bf16.mxu0 %v600
    %820 = vmatpush2.bf16.msra.mxu0 %v599
    %821 = vmatprep.subr.bf16.mxu0 %v598
    %822 = vmatpush2.bf16.msra.mxu0 %v597
    %823 = vmatprep.subr.bf16.mxu0 %v596
    %824 = vmatpush2.bf16.msra.mxu0 %v595
    %825 = vmatprep.subr.bf16.mxu0 %v594
    %826 = vmatpush2.bf16.msra.mxu0 %v593
    %827 = vmatprep.mubr.bf16.mxu0 %v211
    %828 = vmatmul.mubr.bf16.gmra.mxu0 %v210
    %v829 = vpop.f32.mrf.mxu0
    %v830 = vadd.f32 %v789, %v829
    %v831 = vpop.f32.mrf.mxu0
    %v832 = vadd.f32 %v791, %v831
    %v833 = vpop.f32.mrf.mxu0
    %v834 = vpop.f32.mrf.mxu0
    %835 = vdwg.mxu0
    %836 = vmatprep.subr.bf16.mxu0 0
    %837 = vmatpush1.bf16.msra.mxu0 0
    %838 = vmatprep.subr.bf16.mxu0 0
    %839 = vmatpush1.bf16.msra.mxu0 0
    %840 = vmatprep.subr.bf16.mxu0 0
    %841 = vmatpush1.bf16.msra.mxu0 0
    %842 = vmatprep.subr.bf16.mxu0 0
    %843 = vmatpush1.bf16.msra.mxu0 0
    %844 = vmatprep.subr.bf16.mxu0 0
    %845 = vmatpush1.bf16.msra.mxu0 0
    %846 = vmatprep.subr.bf16.mxu0 0
    %847 = vmatpush1.bf16.msra.mxu0 0
    %848 = vmatprep.subr.bf16.mxu0 0
    %849 = vmatpush1.bf16.msra.mxu0 0
    %850 = vmatprep.subr.bf16.mxu0 %v610
    %851 = vmatpush1.bf16.msra.mxu0 %v609
    %852 = vmatprep.subr.bf16.mxu0 0
    %853 = vmatpush2.bf16.msra.mxu0 0
    %854 = vmatprep.subr.bf16.mxu0 0
    %855 = vmatpush2.bf16.msra.mxu0 0
    %856 = vmatprep.subr.bf16.mxu0 0
    %857 = vmatpush2.bf16.msra.mxu0 0
    %858 = vmatprep.subr.bf16.mxu0 0
    %859 = vmatpush2.bf16.msra.mxu0 0
    %860 = vmatprep.subr.bf16.mxu0 0
    %861 = vmatpush2.bf16.msra.mxu0 0
    %862 = vmatprep.subr.bf16.mxu0 0
    %863 = vmatpush2.bf16.msra.mxu0 0
    %864 = vmatprep.subr.bf16.mxu0 0
    %865 = vmatpush2.bf16.msra.mxu0 0
    %866 = vmatprep.subr.bf16.mxu0 0
    %867 = vmatpush2.bf16.msra.mxu0 0
    %868 = vmatprep.mubr.bf16.mxu0 0
    %869 = vmatmul.mubr.bf16.gmra.mxu0 %v711
    %v870 = vpop.f32.mrf.mxu0
    %v871 = vadd.f32 %v830, %v870
    %v872 = vpop.f32.mrf.mxu0
    %v873 = vadd.f32 %v832, %v872
    %v874 = vpop.f32.mrf.mxu0
    %v875 = vpop.f32.mrf.mxu0
    %876 = vdwg.mxu0
    %v877 = vmax.f32 %v871, 0.0
    %v878 = vmax.f32 %v873, 0.0
    %v879 = vpack.c.bf16 %v877, %v877
    %v880 = vpack.c.bf16 %v878, %v878
    %v881 = vld [vmem:[#allocation7] sm:$0xff]
    %v882 = vld [vmem:[#allocation7 + $0x8] sm:$0xff]
    %v883 = vld [vmem:[#allocation7 + $0x10] sm:$0xff]
    %v884 = vld [vmem:[#allocation7 + $0x18] sm:$0xff]
    %v885 = vld [vmem:[#allocation7 + $0x20] sm:$0xff]
    %v886 = vld [vmem:[#allocation7 + $0x28] sm:$0xff]
    %v887 = vld [vmem:[#allocation7 + $0x30] sm:$0xff]
    %v888 = vld [vmem:[#allocation7 + $0x38] sm:$0xff]
    %v889 = vld [vmem:[#allocation7 + $0x40] sm:$0xff]
    %v890 = vld [vmem:[#allocation7 + $0x48] sm:$0xff]
    %v891 = vld [vmem:[#allocation7 + $0x50] sm:$0xff]
    %v892 = vld [vmem:[#allocation7 + $0x58] sm:$0xff]
    %v893 = vld [vmem:[#allocation7 + $0x60] sm:$0xff]
    %v894 = vld [vmem:[#allocation7 + $0x68] sm:$0xff]
    %v895 = vld [vmem:[#allocation7 + $0x70] sm:$0xff]
    %v896 = vld [vmem:[#allocation7 + $0x78] sm:$0xff]
    %v897 = vld [vmem:[#allocation7 + $0x80] sm:$0xff]
    %v898 = vld [vmem:[#allocation7 + $0x88] sm:$0xff]
    %v899 = vld [vmem:[#allocation7 + $0x90] sm:$0xff]
    %v900 = vld [vmem:[#allocation7 + $0x98] sm:$0xff]
    %v901 = vld [vmem:[#allocation7 + $0xa0] sm:$0xff]
    %v902 = vld [vmem:[#allocation7 + $0xa8] sm:$0xff]
    %v903 = vld [vmem:[#allocation7 + $0xb0] sm:$0xff]
    %v904 = vld [vmem:[#allocation7 + $0xb8] sm:$0xff]
    %v905 = vld [vmem:[#allocation7 + $0xc0] sm:$0xff]
    %v906 = vld [vmem:[#allocation7 + $0xc8] sm:$0xff]
    %v907 = vld [vmem:[#allocation7 + $0xd0] sm:$0xff]
    %v908 = vld [vmem:[#allocation7 + $0xd8] sm:$0xff]
    %v909 = vld [vmem:[#allocation7 + $0xe0] sm:$0xff]
    %v910 = vld [vmem:[#allocation7 + $0xe8] sm:$0xff]
    %v911 = vld [vmem:[#allocation7 + $0xf0] sm:$0xff]
    %v912 = vld [vmem:[#allocation7 + $0xf8] sm:$0xff]
    %v913 = vld [vmem:[%s4] sm:$0x3]
    %v915 = vlaneseq
    %v916 = vshrl.u32 %v915, 7
    %v917 = vsub.s32 0, %v916
    %v918 = vrot.slane %v913, %v917
    %v919 = vlaneseq
    %v920 = vshrl.u32 %v919, 7
    %v921 = vsub.s32 1, %v920
    %v922 = vrot.slane %v913, %v921
    %v957 = vunpack.c.l.b16 %v881
    %v958 = vunpack.c.h.b16 %v881
    %v959 = vunpack.c.l.b16 %v882
    %v960 = vunpack.c.h.b16 %v882
    %v961 = vunpack.c.l.b16 %v883
    %v962 = vunpack.c.h.b16 %v883
    %v963 = vunpack.c.l.b16 %v884
    %v964 = vunpack.c.h.b16 %v884
    %v965 = vunpack.c.l.b16 %v885
    %v966 = vunpack.c.h.b16 %v885
    %v967 = vunpack.c.l.b16 %v886
    %v968 = vunpack.c.h.b16 %v886
    %v969 = vunpack.c.l.b16 %v887
    %v970 = vunpack.c.h.b16 %v887
    %v971 = vunpack.c.l.b16 %v888
    %v972 = vunpack.c.h.b16 %v888
    %v973 = vunpack.c.l.b16 %v889
    %v974 = vunpack.c.h.b16 %v889
    %v975 = vunpack.c.l.b16 %v890
    %v976 = vunpack.c.h.b16 %v890
    %v977 = vunpack.c.l.b16 %v891
    %v978 = vunpack.c.h.b16 %v891
    %v979 = vunpack.c.l.b16 %v892
    %v980 = vunpack.c.h.b16 %v892
    %v981 = vunpack.c.l.b16 %v893
    %v982 = vunpack.c.h.b16 %v893
    %v983 = vunpack.c.l.b16 %v894
    %v984 = vunpack.c.h.b16 %v894
    %v985 = vunpack.c.l.b16 %v895
    %v986 = vunpack.c.h.b16 %v895
    %v987 = vunpack.c.l.b16 %v896
    %v988 = vunpack.c.h.b16 %v896
    %v989 = vunpack.c.l.b16 %v897
    %v990 = vunpack.c.h.b16 %v897
    %v991 = vunpack.c.l.b16 %v898
    %v992 = vunpack.c.h.b16 %v898
    %v993 = vunpack.c.l.b16 %v899
    %v994 = vunpack.c.h.b16 %v899
    %v995 = vunpack.c.l.b16 %v900
    %v996 = vunpack.c.h.b16 %v900
    %v997 = vunpack.c.l.b16 %v901
    %v998 = vunpack.c.h.b16 %v901
    %v999 = vunpack.c.l.b16 %v902
    %v1000 = vunpack.c.h.b16 %v902
    %v1001 = vunpack.c.l.b16 %v903
    %v1002 = vunpack.c.h.b16 %v903
    %v1003 = vunpack.c.l.b16 %v904
    %v1004 = vunpack.c.h.b16 %v904
    %v1005 = vunpack.c.l.b16 %v905
    %v1006 = vunpack.c.h.b16 %v905
    %v1007 = vunpack.c.l.b16 %v906
    %v1008 = vunpack.c.h.b16 %v906
    %v1009 = vunpack.c.l.b16 %v907
    %v1010 = vunpack.c.h.b16 %v907
    %v1011 = vunpack.c.l.b16 %v908
    %v1012 = vunpack.c.h.b16 %v908
    %v1013 = vunpack.c.l.b16 %v909
    %v1014 = vunpack.c.h.b16 %v909
    %v1015 = vunpack.c.l.b16 %v910
    %v1016 = vunpack.c.h.b16 %v910
    %v1017 = vunpack.c.l.b16 %v911
    %v1018 = vunpack.c.h.b16 %v911
    %v1019 = vunpack.c.l.b16 %v912
    %v1020 = vunpack.c.h.b16 %v912
    %v1021 = vpack.c.b16 %v959, %v957
    %v1022 = vpack.c.b16 %v960, %v958
    %v1023 = vpack.c.b16 %v963, %v961
    %v1024 = vpack.c.b16 %v964, %v962
    %v1025 = vpack.c.b16 %v967, %v965
    %v1026 = vpack.c.b16 %v968, %v966
    %v1027 = vpack.c.b16 %v971, %v969
    %v1028 = vpack.c.b16 %v972, %v970
    %v1029 = vpack.c.b16 %v975, %v973
    %v1030 = vpack.c.b16 %v976, %v974
    %v1031 = vpack.c.b16 %v979, %v977
    %v1032 = vpack.c.b16 %v980, %v978
    %v1033 = vpack.c.b16 %v983, %v981
    %v1034 = vpack.c.b16 %v984, %v982
    %v1035 = vpack.c.b16 %v987, %v985
    %v1036 = vpack.c.b16 %v988, %v986
    %v1037 = vpack.c.b16 %v991, %v989
    %v1038 = vpack.c.b16 %v992, %v990
    %v1039 = vpack.c.b16 %v995, %v993
    %v1040 = vpack.c.b16 %v996, %v994
    %v1041 = vpack.c.b16 %v999, %v997
    %v1042 = vpack.c.b16 %v1000, %v998
    %v1043 = vpack.c.b16 %v1003, %v1001
    %v1044 = vpack.c.b16 %v1004, %v1002
    %v1045 = vpack.c.b16 %v1007, %v1005
    %v1046 = vpack.c.b16 %v1008, %v1006
    %v1047 = vpack.c.b16 %v1011, %v1009
    %v1048 = vpack.c.b16 %v1012, %v1010
    %v1049 = vpack.c.b16 %v1015, %v1013
    %v1050 = vpack.c.b16 %v1016, %v1014
    %v1051 = vpack.c.b16 %v1019, %v1017
    %v1052 = vpack.c.b16 %v1020, %v1018
    %1085 = vmatprep.subr.bf16.mxu0 %v1036
    %1086 = vmatpush1.bf16.msra.mxu0 %v1035
    %1087 = vmatprep.subr.bf16.mxu0 %v1034
    %1088 = vmatpush1.bf16.msra.mxu0 %v1033
    %1089 = vmatprep.subr.bf16.mxu0 %v1032
    %1090 = vmatpush1.bf16.msra.mxu0 %v1031
    %1091 = vmatprep.subr.bf16.mxu0 %v1030
    %1092 = vmatpush1.bf16.msra.mxu0 %v1029
    %1093 = vmatprep.subr.bf16.mxu0 %v1028
    %1094 = vmatpush1.bf16.msra.mxu0 %v1027
    %1095 = vmatprep.subr.bf16.mxu0 %v1026
    %1096 = vmatpush1.bf16.msra.mxu0 %v1025
    %1097 = vmatprep.subr.bf16.mxu0 %v1024
    %1098 = vmatpush1.bf16.msra.mxu0 %v1023
    %1099 = vmatprep.subr.bf16.mxu0 %v1022
    %1100 = vmatpush1.bf16.msra.mxu0 %v1021
    %1101 = vmatprep.subr.bf16.mxu0 %v1052
    %1102 = vmatpush2.bf16.msra.mxu0 %v1051
    %1103 = vmatprep.subr.bf16.mxu0 %v1050
    %1104 = vmatpush2.bf16.msra.mxu0 %v1049
    %1105 = vmatprep.subr.bf16.mxu0 %v1048
    %1106 = vmatpush2.bf16.msra.mxu0 %v1047
    %1107 = vmatprep.subr.bf16.mxu0 %v1046
    %1108 = vmatpush2.bf16.msra.mxu0 %v1045
    %1109 = vmatprep.subr.bf16.mxu0 %v1044
    %1110 = vmatpush2.bf16.msra.mxu0 %v1043
    %1111 = vmatprep.subr.bf16.mxu0 %v1042
    %1112 = vmatpush2.bf16.msra.mxu0 %v1041
    %1113 = vmatprep.subr.bf16.mxu0 %v1040
    %1114 = vmatpush2.bf16.msra.mxu0 %v1039
    %1115 = vmatprep.subr.bf16.mxu0 %v1038
    %1116 = vmatpush2.bf16.msra.mxu0 %v1037
    %1117 = vmatprep.mubr.bf16.mxu0 %v880
    %1118 = vmatmul.mubr.bf16.gmra.mxu0 %v879
    %v1119 = vpop.f32.mrf.mxu0
    %v1120 = vadd.f32 %v918, %v1119
    %v1121 = vpop.f32.mrf.mxu0
    %v1122 = vadd.f32 %v922, %v1121
    %v1123 = vpop.f32.mrf.mxu0
    %v1124 = vpop.f32.mrf.mxu0
    %1125 = vdwg.mxu0
    %v1126 = vmax.f32 %v1120, 0.0
    %v1127 = vmax.f32 %v1122, 0.0
    %v1128 = vpack.c.bf16 %v1126, %v1126
    %v1129 = vpack.c.bf16 %v1127, %v1127
    %v1130 = vld [vmem:[#allocation8] sm:$0xf]
    %v1131 = vld [vmem:[#allocation8 + $0x4] sm:$0xf]
    %v1132 = vld [vmem:[#allocation8 + $0x8] sm:$0xf]
    %v1133 = vld [vmem:[#allocation8 + $0xc] sm:$0xf]
    %v1134 = vld [vmem:[#allocation8 + $0x10] sm:$0xf]
    %v1135 = vld [vmem:[#allocation8 + $0x14] sm:$0xf]
    %v1136 = vld [vmem:[#allocation8 + $0x18] sm:$0xf]
    %v1137 = vld [vmem:[#allocation8 + $0x1c] sm:$0xf]
    %v1138 = vld [vmem:[#allocation8 + $0x20] sm:$0xf]
    %v1139 = vld [vmem:[#allocation8 + $0x24] sm:$0xf]
    %v1140 = vld [vmem:[#allocation8 + $0x28] sm:$0xf]
    %v1141 = vld [vmem:[#allocation8 + $0x2c] sm:$0xf]
    %v1142 = vld [vmem:[#allocation8 + $0x30] sm:$0xf]
    %v1143 = vld [vmem:[#allocation8 + $0x34] sm:$0xf]
    %v1144 = vld [vmem:[#allocation8 + $0x38] sm:$0xf]
    %v1145 = vld [vmem:[#allocation8 + $0x3c] sm:$0xf]
    %v1146 = vld [vmem:[#allocation8 + $0x40] sm:$0xf]
    %v1147 = vld [vmem:[#allocation8 + $0x44] sm:$0xf]
    %v1148 = vld [vmem:[#allocation8 + $0x48] sm:$0xf]
    %v1149 = vld [vmem:[#allocation8 + $0x4c] sm:$0xf]
    %v1150 = vld [vmem:[#allocation8 + $0x50] sm:$0xf]
    %v1151 = vld [vmem:[#allocation8 + $0x54] sm:$0xf]
    %v1152 = vld [vmem:[#allocation8 + $0x58] sm:$0xf]
    %v1153 = vld [vmem:[#allocation8 + $0x5c] sm:$0xf]
    %v1154 = vld [vmem:[#allocation8 + $0x60] sm:$0xf]
    %v1155 = vld [vmem:[#allocation8 + $0x64] sm:$0xf]
    %v1156 = vld [vmem:[#allocation8 + $0x68] sm:$0xf]
    %v1157 = vld [vmem:[#allocation8 + $0x6c] sm:$0xf]
    %v1158 = vld [vmem:[#allocation8 + $0x70] sm:$0xf]
    %v1159 = vld [vmem:[#allocation8 + $0x74] sm:$0xf]
    %v1160 = vld [vmem:[#allocation8 + $0x78] sm:$0xf]
    %v1161 = vld [vmem:[#allocation8 + $0x7c] sm:$0xf]
    %v1162 = vld [vmem:[%s6] sm:$0x1]
    %v1164 = vlaneseq
    %v1165 = vshrl.u32 %v1164, 7
    %v1166 = vsub.s32 0, %v1165
    %v1167 = vrot.slane %v1162, %v1166
    %v1201 = vunpack.c.l.b16 %v1130
    %v1202 = vunpack.c.l.b16 %v1131
    %v1203 = vunpack.c.l.b16 %v1132
    %v1204 = vunpack.c.l.b16 %v1133
    %v1205 = vunpack.c.l.b16 %v1134
    %v1206 = vunpack.c.l.b16 %v1135
    %v1207 = vunpack.c.l.b16 %v1136
    %v1208 = vunpack.c.l.b16 %v1137
    %v1209 = vunpack.c.l.b16 %v1138
    %v1210 = vunpack.c.l.b16 %v1139
    %v1211 = vunpack.c.l.b16 %v1140
    %v1212 = vunpack.c.l.b16 %v1141
    %v1213 = vunpack.c.l.b16 %v1142
    %v1214 = vunpack.c.l.b16 %v1143
    %v1215 = vunpack.c.l.b16 %v1144
    %v1216 = vunpack.c.l.b16 %v1145
    %v1217 = vunpack.c.l.b16 %v1146
    %v1218 = vunpack.c.l.b16 %v1147
    %v1219 = vunpack.c.l.b16 %v1148
    %v1220 = vunpack.c.l.b16 %v1149
    %v1221 = vunpack.c.l.b16 %v1150
    %v1222 = vunpack.c.l.b16 %v1151
    %v1223 = vunpack.c.l.b16 %v1152
    %v1224 = vunpack.c.l.b16 %v1153
    %v1225 = vunpack.c.l.b16 %v1154
    %v1226 = vunpack.c.l.b16 %v1155
    %v1227 = vunpack.c.l.b16 %v1156
    %v1228 = vunpack.c.l.b16 %v1157
    %v1229 = vunpack.c.l.b16 %v1158
    %v1230 = vunpack.c.l.b16 %v1159
    %v1231 = vunpack.c.l.b16 %v1160
    %v1232 = vunpack.c.l.b16 %v1161
    %v1233 = vpack.c.b16 %v1202, %v1201
    %v1234 = vpack.c.b16 %v1204, %v1203
    %v1235 = vpack.c.b16 %v1206, %v1205
    %v1236 = vpack.c.b16 %v1208, %v1207
    %v1237 = vpack.c.b16 %v1210, %v1209
    %v1238 = vpack.c.b16 %v1212, %v1211
    %v1239 = vpack.c.b16 %v1214, %v1213
    %v1240 = vpack.c.b16 %v1216, %v1215
    %v1241 = vpack.c.b16 %v1218, %v1217
    %v1242 = vpack.c.b16 %v1220, %v1219
    %v1243 = vpack.c.b16 %v1222, %v1221
    %v1244 = vpack.c.b16 %v1224, %v1223
    %v1245 = vpack.c.b16 %v1226, %v1225
    %v1246 = vpack.c.b16 %v1228, %v1227
    %v1247 = vpack.c.b16 %v1230, %v1229
    %v1248 = vpack.c.b16 %v1232, %v1231
    %1265 = vmatprep.subr.bf16.mxu0 0
    %1266 = vmatpush1.bf16.msra.mxu0 %v1240
    %1267 = vmatprep.subr.bf16.mxu0 0
    %1268 = vmatpush1.bf16.msra.mxu0 %v1239
    %1269 = vmatprep.subr.bf16.mxu0 0
    %1270 = vmatpush1.bf16.msra.mxu0 %v1238
    %1271 = vmatprep.subr.bf16.mxu0 0
    %1272 = vmatpush1.bf16.msra.mxu0 %v1237
    %1273 = vmatprep.subr.bf16.mxu0 0
    %1274 = vmatpush1.bf16.msra.mxu0 %v1236
    %1275 = vmatprep.subr.bf16.mxu0 0
    %1276 = vmatpush1.bf16.msra.mxu0 %v1235
    %1277 = vmatprep.subr.bf16.mxu0 0
    %1278 = vmatpush1.bf16.msra.mxu0 %v1234
    %1279 = vmatprep.subr.bf16.mxu0 0
    %1280 = vmatpush1.bf16.msra.mxu0 %v1233
    %1281 = vmatprep.subr.bf16.mxu0 0
    %1282 = vmatpush2.bf16.msra.mxu0 %v1248
    %1283 = vmatprep.subr.bf16.mxu0 0
    %1284 = vmatpush2.bf16.msra.mxu0 %v1247
    %1285 = vmatprep.subr.bf16.mxu0 0
    %1286 = vmatpush2.bf16.msra.mxu0 %v1246
    %1287 = vmatprep.subr.bf16.mxu0 0
    %1288 = vmatpush2.bf16.msra.mxu0 %v1245
    %1289 = vmatprep.subr.bf16.mxu0 0
    %1290 = vmatpush2.bf16.msra.mxu0 %v1244
    %1291 = vmatprep.subr.bf16.mxu0 0
    %1292 = vmatpush2.bf16.msra.mxu0 %v1243
    %1293 = vmatprep.subr.bf16.mxu0 0
    %1294 = vmatpush2.bf16.msra.mxu0 %v1242
    %1295 = vmatprep.subr.bf16.mxu0 0
    %1296 = vmatpush2.bf16.msra.mxu0 %v1241
    %1297 = vmatprep.mubr.bf16.mxu0 %v1129
    %1298 = vmatmul.mubr.bf16.gmra.mxu0 %v1128
    %v1299 = vpop.f32.mrf.mxu0
    %v1300 = vadd.f32 %v1167, %v1299
    %v1301 = vpop.f32.mrf.mxu0
    %v1302 = vpop.f32.mrf.mxu0
    %v1303 = vpop.f32.mrf.mxu0
    %1304 = vdwg.mxu0
    %1305 = vmax.xlane.f32.xlu0 %v1300
    %v1306 = vpop.xlane.xlu0 %1305
    %v1307 = vsub.f32 %v1300, %v1306
    %v1308 = vmul.f32 %v1307, 1.442695
    %v1309 = vpow.pop %v1308
    %1310 = vadd.xlane.f32.xlu0 %v1309
    %v1311 = vpop.xlane.xlu0 %1310
    %v1312 = vrcp.pop %v1311
    %v1313 = vmul.f32 %v1309, %v1312
    %1314 = vst [vmem:[#allocation10] sm:$0xff] %v1313
    // Predicated region
    $region46: #{tpu_custom_call.1} parent=1 // pred_check
      _
    $region47: #{tpu_custom_call.1} parent=1 // pred_check_branch
      %1316 = sbr.rel (0) target = $region49
    $region48: #{tpu_custom_call.1} parent=1 // pred_region
      %s1318 = ssub.s32 128, 128
      %1319 = vsyncadd [#allocation4], %s1318
      %s1321 = sshll.u32 [#allocation10], 4
      %s1322 = int_to_ptr.vmem [resolvable:$true] %s1321
      %1324 = dma.vmem_to_hbm [thread:$0]  %s1322, 128, %s7, [#allocation4]
    $region49: #{tpu_custom_call.1} parent=1 // pred_fallthru
      _
    // Predicated region
    $region50: #{tpu_custom_call.1} parent=1 // pred_check
      _
    $region51: #{tpu_custom_call.1} parent=1 // pred_check_branch
      %1326 = sbr.rel (0) target = $region53
    $region52: #{tpu_custom_call.1} parent=1 // pred_region
      %1327 = dma.done [#allocation4], 128
    $region53: #{tpu_custom_call.1} parent=1 // pred_fallthru
      _
    %1328 = vsyncpa [#allocation3], 1
    %1329 = vsyncpa [#allocation6], 1
    %1330 = vsyncpa [#allocation9], 1
    %1331 = vsyncpa [#allocation4], 1

</llo_original>
